<compile_context>
chip_gen: v5e
topology: v5e:2x2
jax: 0.10.0
libtpu: 0.0.40
codegen_flags: <defaults>
</compile_context>

<pallas_src>
import jax
import jax.numpy as jnp
from jax.experimental import pallas as pl
from jax.experimental.pallas import tpu as pltpu


def _normalize_kernel(scale_ref, bias_ref, x_ref, o_ref):
    # x_ref/o_ref: (R_TILE, L_TILE) tile; scale/bias: (R_TILE, 1) f32 columns.
    # FMA in f32 (kernel is HBM-bound, VALU slack is huge, so the converts
    # are free) -> no low-precision bias/FMA error for bf16/f16 inputs.
    x = x_ref[...].astype(jnp.float32)
    o_ref[...] = (x * scale_ref[...] + bias_ref[...]).astype(o_ref.dtype)


def _hw_budget():
    """(max_block_bytes, vmem_limit_bytes) chosen per TPU generation."""
    vmem_cap = 128 * 1024 * 1024
    try:
        info = pltpu.get_tpu_info()
        vmem_cap = int(getattr(info, "vmem_capacity_bytes", vmem_cap) or vmem_cap)
    except Exception:
        pass
    if vmem_cap <= 64 * 1024 * 1024:
        # v7x: 64 MiB physical per TC -> ~6 MiB blocks, 48 MiB scoped limit
        # (double-buffered in+out = 4 x 6 = 24 MiB, ample headroom).
        return 6 * 1024 * 1024, 48 * 1024 * 1024
    # v5e / v6e: 128 MiB physical -> ~8 MiB blocks, 64 MiB scoped limit.
    return 8 * 1024 * 1024, 64 * 1024 * 1024


def _sublane_min(itemsize):
    # Sub-32-bit dtypes pack along sublanes: a bf16 vreg is [16,128], int8 [32,128].
    return {4: 8, 2: 16, 1: 32}.get(itemsize, 8)


def _choose_tiles(rows, hw, itemsize, max_block_bytes, min_blocks=2):
    """Pick (r_tile, l_tile): lane-dense, contiguous-first, >= min_blocks blocks."""
    sublane = _sublane_min(itemsize)
    max_elems = max(sublane * 128, max_block_bytes // itemsize)

    if rows * hw <= max_elems:
        # Whole array fits in one block.
        r_tile, l_tile = rows, hw
    elif sublane * hw <= max_elems:
        # Full-row blocks: one contiguous HBM DMA per block; grow the sublane
        # count toward the block budget.
        l_tile = hw
        r_tile = sublane
        while r_tile * 2 <= rows and r_tile * 2 * hw <= max_elems:
            r_tile *= 2
    else:
        # H*W too large even for one sublane-minimum row group: chunk lanes
        # in 128-aligned pieces, preferring an exact divisor of hw.
        r_tile = rows if rows <= sublane else sublane
        budget = max(128, max_elems // r_tile)
        l_tile = min(hw, (budget // 128) * 128)
        for t in range(l_tile, 127, -128):
            if hw % t == 0:
                l_tile = t
                break

    # Guarantee >= min_blocks grid steps: v7x has 2 TensorCores and a 1-block
    # grid leaves one idle (forfeits ~half the DMA bandwidth).
    def n_blocks(rt, lt):
        return pl.cdiv(rows, rt) * pl.cdiv(hw, lt)

    for _ in range(64):
        if n_blocks(r_tile, l_tile) >= min_blocks:
            break
        if r_tile % sublane == 0 and r_tile >= 2 * sublane:
            r_tile = max(sublane, ((r_tile // 2) // sublane) * sublane)
        elif l_tile > 128 and l_tile % 128 == 0:
            l_tile = max(128, ((l_tile // 2) // 128) * 128)
        elif l_tile == hw and hw > 128:
            # Full-extent lane tile that isn't 128-aligned: chop at the
            # largest 128 multiple below hw (ragged final block is masked).
            l_tile = max(128, ((hw - 1) // 128) * 128)
        else:
            break  # array too small to split further; a single block is fine

    return r_tile, l_tile


def normalize(x, mean, std):
    """x: (N, C, H, W); mean, std: (C,). Returns (x - mean[c]) / std[c]."""
    N, C, H, W = x.shape
    assert mean.shape == (C,) and std.shape == (C,)
    rows, hw = N * C, H * W
    dtype = x.dtype
    itemsize = jnp.dtype(dtype).itemsize

    # Fold the divide into a multiply-add: y = x * (1/std) + (-mean/std).
    # Kept in f32; the kernel does the FMA in f32 and casts the result once.
    std_f32 = std.astype(jnp.float32)
    mean_f32 = mean.astype(jnp.float32)
    scale = 1.0 / std_f32
    bias = -(mean_f32 / std_f32)
    scale_rows = jnp.tile(scale, N).reshape(rows, 1)
    bias_rows = jnp.tile(bias, N).reshape(rows, 1)

    x2 = x.reshape(rows, hw)

    max_block_bytes, vmem_limit = _hw_budget()
    r_tile, l_tile = _choose_tiles(rows, hw, itemsize, max_block_bytes)
    grid = (pl.cdiv(rows, r_tile), pl.cdiv(hw, l_tile))

    cost = pl.CostEstimate(
        flops=2 * rows * hw,
        transcendentals=0,
        bytes_accessed=2 * rows * hw * itemsize + 2 * rows * 4,
    )

    out2 = pl.pallas_call(
        _normalize_kernel,
        out_shape=jax.ShapeDtypeStruct((rows, hw), dtype),
        grid=grid,
        in_specs=[
            pl.BlockSpec((r_tile, 1), lambda r, l: (r, 0)),        # scale (f32)
            pl.BlockSpec((r_tile, 1), lambda r, l: (r, 0)),        # bias  (f32)
            pl.BlockSpec((r_tile, l_tile), lambda r, l: (r, l)),   # x
        ],
        out_specs=pl.BlockSpec((r_tile, l_tile), lambda r, l: (r, l)),
        compiler_params=pltpu.CompilerParams(
            dimension_semantics=("parallel", "parallel"),
            vmem_limit_bytes=vmem_limit,
        ),
        cost_estimate=cost,
    )(scale_rows, bias_rows, x2)

    return out2.reshape(N, C, H, W)


if __name__ == "__main__":
    key = jax.random.PRNGKey(0)

    # Deterministic ImageNet-style normalization constants (module buffers).
    mean = jnp.array([0.485, 0.456, 0.406], dtype=jnp.float32)
    std = jnp.array([0.229, 0.224, 0.225], dtype=jnp.float32)

    def reference(x):
        return (x - mean.reshape(1, 3, 1, 1)) / std.reshape(1, 3, 1, 1)

    k1, k2 = jax.random.split(key)

    # Main case: matches the module's (1, 3, 1, 1) broadcast.
    x = jax.random.normal(k1, (2, 3, 16, 16), dtype=jnp.float32)
    out = jax.block_until_ready(normalize(x, mean, std))
    ref = reference(x)
    assert out.shape == ref.shape and out.dtype == ref.dtype
    assert jnp.allclose(out, ref, atol=1e-5, rtol=1e-5)

    # Ragged case: H*W not a multiple of 128 and N*C not a multiple of 8
    # (exercises the masked final-block path).
    x_r = jax.random.normal(k2, (2, 3, 10, 13), dtype=jnp.float32)
    out_r = jax.block_until_ready(normalize(x_r, mean, std))
    assert jnp.allclose(out_r, reference(x_r), atol=1e-5, rtol=1e-5)

    print("KERNEL_OK")
</pallas_src>

<mosaic_0001>
module attributes {stable_mosaic.version = 11 : i64} {
  func.func @_normalize_kernel(%arg0: i32, %arg1: i32, %arg2: memref<6x1xf32, #tpu.memory_space<vmem>>, %arg3: memref<6x1xf32, #tpu.memory_space<vmem>>, %arg4: memref<6x128xf32, #tpu.memory_space<vmem>>, %arg5: memref<6x128xf32, #tpu.memory_space<vmem>>) attributes {dimension_semantics = [#tpu.dimension_semantics<parallel>, #tpu.dimension_semantics<parallel>], iteration_bounds = array<i64: 1, 2>, scalar_prefetch = 0 : i64, scratch_operands = 0 : i64, tpu.core_type = #tpu.core_type<tc>, window_params = [{transform_indices = @transform_0, window_bounds = array<i64: 6, 1>}, {transform_indices = @transform_1, window_bounds = array<i64: 6, 1>}, {transform_indices = @transform_2, window_bounds = array<i64: 6, 128>}, {transform_indices = @transform_3, window_bounds = array<i64: 6, 128>}]} {
    %c0 = arith.constant 0 : index
    %c0_0 = arith.constant 0 : index
    %0 = vector.load %arg4[%c0, %c0_0] : memref<6x128xf32, #tpu.memory_space<vmem>>, vector<6x128xf32>
    %c0_1 = arith.constant 0 : index
    %c0_2 = arith.constant 0 : index
    %1 = vector.load %arg2[%c0_1, %c0_2] : memref<6x1xf32, #tpu.memory_space<vmem>>, vector<6x1xf32>
    %2 = vector.broadcast %1 : vector<6x1xf32> to vector<6x128xf32>
    %3 = arith.mulf %0, %2 : vector<6x128xf32>
    %c0_3 = arith.constant 0 : index
    %c0_4 = arith.constant 0 : index
    %4 = vector.load %arg3[%c0_3, %c0_4] : memref<6x1xf32, #tpu.memory_space<vmem>>, vector<6x1xf32>
    %5 = vector.broadcast %4 : vector<6x1xf32> to vector<6x128xf32>
    %6 = arith.addf %3, %5 : vector<6x128xf32>
    %c0_5 = arith.constant 0 : index
    %c0_6 = arith.constant 0 : index
    %7 = vector.load %arg5[%c0_5, %c0_6] : memref<6x128xf32, #tpu.memory_space<vmem>>, vector<6x128xf32>
    tpu.vector_store %arg5[%c0_5, %c0_6], %6 {strides = array<i32>} : memref<6x128xf32, #tpu.memory_space<vmem>>, vector<6x128xf32>,
    return
  }
  func.func @transform_0(%arg0: i32, %arg1: i32) -> (i32, i32) {
    %c0_i32 = arith.constant 0 : i32
    %c0_i32_0 = arith.constant 0 : i32
    return %arg0, %c0_i32 : i32, i32
  }
  func.func @transform_1(%arg0: i32, %arg1: i32) -> (i32, i32) {
    %c0_i32 = arith.constant 0 : i32
    %c0_i32_0 = arith.constant 0 : i32
    return %arg0, %c0_i32 : i32, i32
  }
  func.func @transform_2(%arg0: i32, %arg1: i32) -> (i32, i32) {
    %c0_i32 = arith.constant 0 : i32
    return %arg0, %arg1 : i32, i32
  }
  func.func @transform_3(%arg0: i32, %arg1: i32) -> (i32, i32) {
    %c0_i32 = arith.constant 0 : i32
    return %arg0, %arg1 : i32, i32
  }
}

</mosaic_0001>

<llo_original>
// kernel: tpu_custom_call.1
$region0: #{tpu_custom_call.1}
  #allocation0 [shape = 'u32[]', space=smem, size = 0x4, offset = 0x4, fixed_abs, tag = 'smem constant byte address 0x4 - core index']
  #allocation1 [shape = 'u32[72,128]{1,0:T(1,128)}', space=vmem, size = 0x9000, scoped, tag = 'internal scratch']
  %s0 = inlined_call_operand.vmem [shape: f32[6,1], index: 0, kind: input, shape index: {}]
  %s1 = inlined_call_operand.vmem [shape: f32[6,1], index: 1, kind: input, shape index: {}]
  %s2 = inlined_call_operand.vmem [shape: f32[6,256], index: 2, kind: input, shape index: {}]
  %s3 = inlined_call_operand.hbm [shape: f32[6,256], index: 3, kind: output, shape index: {}]
  %s4 = sld [smem:[#allocation0]]
  $region45: #{tpu_custom_call.1} parent=0
    _
  %s6 = ssub.s32 1, %s4
  %s7 = scalar_select 0, %s6, %s4
  $region1: #{tpu_custom_call.1} parent=0
    #allocation2 [shape = 'u8[8192]{0}', space=vmem, size = 0x2000, scoped, tag = 'output window, operand 0']
    #allocation3 [shape = 's32[2]{0}', space=sflag, size = 0x8, scoped, tag = 'scoped memory for tpu_custom_call.1']
    %8 = vsyncpa [#allocation3], 0
    %s9 = scalar_lea.sflag [#allocation3], 1
    %10 = vsyncpa %s9, 0
    loop: start=0, step=1, limit=4
    $region2: #{tpu_custom_call.1} parent=1 // loop_pre_header
      _
    $region3: #{tpu_custom_call.1} parent=1 // loop_header
      %s12 = sphi 0, %s16
      %p13 = scmp.ge.s32.totalorder %s12, 4
      %s19 = sphi 0, %s31
      %s20 = sphi 0, %s27
      %s21 = sphi 0, %s19
      %s22 = sphi 0, %s20
      %s23 = sphi 0, %s21
      %s24 = sphi 0, %s22
      %s34 = sphi 0, %s36
      %s37 = sphi 0, %s34
      %s38 = sphi 0, %s37
      %s54 = sphi 0, %s38
      %s60 = sphi 0, %s62
      %s63 = sphi 0, %s60
      %s64 = sphi 0, %s63
      %s80 = sphi 0, %s64
      %s88 = sphi 0, %s90
      %s91 = sphi 0, %s88
      %s92 = sphi 0, %s91
      %s108 = sphi 0, %s92
      %s116 = sphi 0, %s118
      %s119 = sphi 0, %s116
      %s120 = sphi 0, %s119
      %s136 = sphi 0, %s120
    $region4: #{tpu_custom_call.1} parent=1 // loop_header_branch
      %15 = sbr.rel (%p13) target = $region8
    $region5: #{tpu_custom_call.1} parent=1 // loop_body
      %s17 = ssub.s32 %s12, 1
      %s18 = ssub.s32 %s12, 2
      %s25 = sadd.s32 1, %s20
      %p26 = scmp.ge.s32.totalorder %s25, 2
      %s27 = scalar_select %p26, 0, %s25
      %s28 = sadd.s32 1, %s19
      %s29 = scalar_select %p26, %s28, %s19
      %p30 = scmp.ge.s32.totalorder %s29, 1
      %s31 = scalar_select %p30, 0, %s29
      %s32 = ssub.s32 %s19, %s31
      %p33 = scmp.eq.s32.totalorder %s32, 0
      %s35 = sadd.s32 %s34, 1
      %s36 = scalar_select %p33, %s34, %s35
      %p39 = pneg %p33
      %p40 = scmp.eq.s32.totalorder %s12, 1
      %p41 = por %p39, %p40
      %p42 = scmp.ne.s32.totalorder %s34, %s37
      %p43 = scmp.eq.s32.totalorder %s12, 0
      %p44 = por %p42, %p43
      %p45 = scmp.ne.s32.totalorder %s34, %s37
      %p46 = scmp.eq.s32.totalorder %s17, 1
      %p47 = por %p45, %p46
      %p48 = scmp.ne.s32.totalorder %s37, %s38
      %p49 = scmp.eq.s32.totalorder %s17, 0
      %p50 = por %p48, %p49
      %p51 = scmp.ne.s32.totalorder %s37, %s38
      %p52 = scmp.eq.s32.totalorder %s18, 1
      %p53 = por %p51, %p52
      %p55 = scmp.ne.s32.totalorder %s38, %s54
      %p56 = scmp.eq.s32.totalorder %s18, 0
      %p57 = por %p55, %p56
      %s58 = ssub.s32 %s19, %s31
      %p59 = scmp.eq.s32.totalorder %s58, 0
      %s61 = sadd.s32 %s60, 1
      %s62 = scalar_select %p59, %s60, %s61
      %p65 = pneg %p59
      %p66 = scmp.eq.s32.totalorder %s12, 1
      %p67 = por %p65, %p66
      %p68 = scmp.ne.s32.totalorder %s60, %s63
      %p69 = scmp.eq.s32.totalorder %s12, 0
      %p70 = por %p68, %p69
      %p71 = scmp.ne.s32.totalorder %s60, %s63
      %p72 = scmp.eq.s32.totalorder %s17, 1
      %p73 = por %p71, %p72
      %p74 = scmp.ne.s32.totalorder %s63, %s64
      %p75 = scmp.eq.s32.totalorder %s17, 0
      %p76 = por %p74, %p75
      %p77 = scmp.ne.s32.totalorder %s63, %s64
      %p78 = scmp.eq.s32.totalorder %s18, 1
      %p79 = por %p77, %p78
      %p81 = scmp.ne.s32.totalorder %s64, %s80
      %p82 = scmp.eq.s32.totalorder %s18, 0
      %p83 = por %p81, %p82
      %s84 = ssub.s32 %s19, %s31
      %s85 = ssub.s32 %s20, %s27
      %s86 = sor.u32 %s84, %s85
      %p87 = scmp.eq.s32.totalorder %s86, 0
      %s89 = sadd.s32 %s88, 1
      %s90 = scalar_select %p87, %s88, %s89
      %p93 = pneg %p87
      %p94 = scmp.eq.s32.totalorder %s12, 1
      %p95 = por %p93, %p94
      %p96 = scmp.ne.s32.totalorder %s88, %s91
      %p97 = scmp.eq.s32.totalorder %s12, 0
      %p98 = por %p96, %p97
      %p99 = scmp.ne.s32.totalorder %s88, %s91
      %p100 = scmp.eq.s32.totalorder %s17, 1
      %p101 = por %p99, %p100
      %p102 = scmp.ne.s32.totalorder %s91, %s92
      %p103 = scmp.eq.s32.totalorder %s17, 0
      %p104 = por %p102, %p103
      %p105 = scmp.ne.s32.totalorder %s91, %s92
      %p106 = scmp.eq.s32.totalorder %s18, 1
      %p107 = por %p105, %p106
      %p109 = scmp.ne.s32.totalorder %s92, %s108
      %p110 = scmp.eq.s32.totalorder %s18, 0
      %p111 = por %p109, %p110
      %s112 = ssub.s32 %s19, %s31
      %s113 = ssub.s32 %s20, %s27
      %s114 = sor.u32 %s112, %s113
      %p115 = scmp.eq.s32.totalorder %s114, 0
      %s117 = sadd.s32 %s116, 1
      %s118 = scalar_select %p115, %s116, %s117
      %p121 = pneg %p115
      %p122 = scmp.eq.s32.totalorder %s12, 1
      %p123 = por %p121, %p122
      %p124 = scmp.ne.s32.totalorder %s116, %s119
      %p125 = scmp.eq.s32.totalorder %s12, 0
      %p126 = por %p124, %p125
      %p127 = scmp.ne.s32.totalorder %s116, %s119
      %p128 = scmp.eq.s32.totalorder %s17, 1
      %p129 = por %p127, %p128
      %p130 = scmp.ne.s32.totalorder %s119, %s120
      %p131 = scmp.eq.s32.totalorder %s17, 0
      %p132 = por %p130, %p131
      %p133 = scmp.ne.s32.totalorder %s119, %s120
      %p134 = scmp.eq.s32.totalorder %s18, 1
      %p135 = por %p133, %p134
      %p137 = scmp.ne.s32.totalorder %s120, %s136
      %p138 = scmp.eq.s32.totalorder %s18, 0
      %p139 = por %p137, %p138
      %p140 = scmp.le.s32.totalorder 1, %s12
      %p141 = scmp.lt.s32.totalorder %s12, 3
      %p142 = pnand %p140, %p141
      %p143 = pneg %p142
      // Predicated region
      $region9: #{tpu_custom_call.1} parent=5 // pred_check
        _
      $region10: #{tpu_custom_call.1} parent=5 // pred_check_branch
        %145 = sbr.rel (%p142) target = $region12
      $region11: #{tpu_custom_call.1} parent=5 // pred_region
        %s146 = ssub.s32 %s12, 1
        // Predicated region
        $region13: #{tpu_custom_call.1} parent=11 // pred_check
          %p147 = pneg %p50
        $region14: #{tpu_custom_call.1} parent=11 // pred_check_branch
          %149 = sbr.rel (%p147) target = $region16
        $region15: #{tpu_custom_call.1} parent=11 // pred_region
          %p150 = scmp.lt.s32.totalorder %s21, 0
          %s151 = scalar_select %p150, %s21, 0
          %s152 = smul.addr %s151, 8
          %s153 = scalar_lea.vmem %s0, %s152
        $region16: #{tpu_custom_call.1} parent=11 // pred_fallthru
          _
        // Predicated region
        $region17: #{tpu_custom_call.1} parent=11 // pred_check
          %p154 = pneg %p76
        $region18: #{tpu_custom_call.1} parent=11 // pred_check_branch
          %156 = sbr.rel (%p154) target = $region20
        $region19: #{tpu_custom_call.1} parent=11 // pred_region
          %p157 = scmp.lt.s32.totalorder %s21, 0
          %s158 = scalar_select %p157, %s21, 0
          %s159 = smul.addr %s158, 8
          %s160 = scalar_lea.vmem %s1, %s159
        $region20: #{tpu_custom_call.1} parent=11 // pred_fallthru
          _
      $region12: #{tpu_custom_call.1} parent=5 // pred_fallthru
        _
      %p161 = scmp.lt.s32.totalorder %s12, 2
      // Predicated region
      $region21: #{tpu_custom_call.1} parent=5 // pred_check
        %p162 = pneg %p161
      $region22: #{tpu_custom_call.1} parent=5 // pred_check_branch
        %164 = sbr.rel (%p162) target = $region24
      $region23: #{tpu_custom_call.1} parent=5 // pred_region
        // Predicated region
        $region25: #{tpu_custom_call.1} parent=23 // pred_check
          %p165 = pneg %p98
        $region26: #{tpu_custom_call.1} parent=23 // pred_check_branch
          %167 = sbr.rel (%p165) target = $region28
        $region27: #{tpu_custom_call.1} parent=23 // pred_region
          %p168 = scmp.lt.s32.totalorder %s19, 0
          %s169 = scalar_select %p168, %s19, 0
          %p170 = scmp.lt.s32.totalorder %s20, 1
          %s171 = scalar_select %p170, %s20, 1
          %s172 = smul.addr %s169, 2
          %s173 = sadd.s32 %s171, %s172
          %s174 = smul.addr %s173, 8
          %s175 = scalar_lea.vmem %s2, %s174
        $region28: #{tpu_custom_call.1} parent=23 // pred_fallthru
          _
      $region24: #{tpu_custom_call.1} parent=5 // pred_fallthru
        _
      %p176 = scmp.le.s32.totalorder 1, %s12
      %p177 = scmp.lt.s32.totalorder %s12, 3
      %p178 = pnand %p176, %p177
      %p179 = pneg %p178
      // Predicated region
      $region29: #{tpu_custom_call.1} parent=5 // pred_check
        _
      $region30: #{tpu_custom_call.1} parent=5 // pred_check_branch
        %181 = sbr.rel (%p178) target = $region32
      $region31: #{tpu_custom_call.1} parent=5 // pred_region
        %s182 = ssub.s32 %s12, 1
        %p183 = scmp.lt.s32.totalorder %s21, 0
        %s184 = scalar_select %p183, %s21, 0
        %s185 = smul.addr %s184, 8
        %s186 = scalar_lea.vmem %s0, %s185
        %p187 = pneg %p50
        %p188 = pneg %p47
        %p189 = scmp.lt.s32.totalorder %s21, 0
        %s190 = scalar_select %p189, %s21, 0
        %s191 = smul.addr %s190, 8
        %s192 = scalar_lea.vmem %s1, %s191
        %p193 = pneg %p76
        %p194 = pneg %p73
        %p195 = scmp.lt.s32.totalorder %s21, 0
        %s196 = scalar_select %p195, %s21, 0
        %p197 = scmp.lt.s32.totalorder %s22, 1
        %s198 = scalar_select %p197, %s22, 1
        %s199 = smul.addr %s196, 2
        %s200 = sadd.s32 %s198, %s199
        %s201 = smul.addr %s200, 8
        %s202 = scalar_lea.vmem %s2, %s201
        %p203 = pneg %p104
        %p204 = pneg %p101
        %p205 = pneg %p132
        %p206 = pneg %p129
        %s207 = sand.u32 %s119, 1
        %s208 = scalar_lea.sflag [#allocation3], %s207
        %s209 = sand.u32 %s119, 1
        %s210 = smul.addr %s209, 8
        %s211 = scalar_lea.vmem [#allocation2], %s210
        %p212 = scmp.lt.s32.totalorder %s21, 0
        %s213 = scalar_select %p212, %s21, 0
        %s214 = smul.addr %s213, 8
        %s215 = scalar_lea.vmem %s0, %s214
        %p216 = scmp.lt.s32.totalorder %s21, 0
        %s217 = scalar_select %p216, %s21, 0
        %s218 = smul.addr %s217, 8
        %s219 = scalar_lea.vmem %s1, %s218
        %p220 = scmp.lt.s32.totalorder %s21, 0
        %s221 = scalar_select %p220, %s21, 0
        %p222 = scmp.lt.s32.totalorder %s22, 1
        %s223 = scalar_select %p222, %s22, 1
        %s224 = smul.addr %s221, 2
        %s225 = sadd.s32 %s223, %s224
        %s226 = smul.addr %s225, 8
        %s227 = scalar_lea.vmem %s2, %s226
        %v228 = vld [vmem:[%s227] sm:$0x3f]
        %v229 = vld [vmem:[%s215] sm:$0x3f]
        %231 = vset.pattern.permute.xlu0 0
        %232 = vperm.xlu0 %231, %v229
        %v233 = vpop.permute.xlu0 %232
        %v235 = vmul.f32 %v228, %v233
        %v236 = vld [vmem:[%s219] sm:$0x3f]
        %238 = vset.pattern.permute.xlu0 0
        %239 = vperm.xlu0 %238, %v236
        %v240 = vpop.permute.xlu0 %239
        %v242 = vadd.f32 %v235, %v240
        %243 = vst [vmem:[%s211] sm:$0x3f] %v242
        %s244 = sand.u32 %s119, 1
        %s245 = scalar_lea.sflag [#allocation3], %s244
        %s246 = sand.u32 %s119, 1
        %s247 = smul.addr %s246, 8
        %s248 = scalar_lea.vmem [#allocation2], %s247
        // Predicated region
        $region33: #{tpu_custom_call.1} parent=31 // pred_check
          %p249 = pneg %p129
        $region34: #{tpu_custom_call.1} parent=31 // pred_check_branch
          %251 = sbr.rel (%p249) target = $region36
        $region35: #{tpu_custom_call.1} parent=31 // pred_region
          %253 = vsyncadd %s245, 0
          %s254 = smul.addr %s21, 2
          %s255 = sadd.s32 %s22, %s254
          %s256 = smul.addr %s255, 8
          %s257 = scalar_lea.hbm %s3, %s256
          %s259 = sshll.u32 %s248, 4
          %s260 = int_to_ptr.vmem [resolvable:$true] %s259
          %s261 = sshll.u32 %s257, 4
          %s262 = int_to_ptr.hbm [resolvable:$true] %s261
          %264 = dma.vmem_to_hbm [thread:$0]  %s260, 128, %s262, %s245
        $region36: #{tpu_custom_call.1} parent=31 // pred_fallthru
          _
      $region32: #{tpu_custom_call.1} parent=5 // pred_fallthru
        _
      %p265 = scmp.le.s32.totalorder 2, %s12
      // Predicated region
      $region37: #{tpu_custom_call.1} parent=5 // pred_check
        %p266 = pneg %p265
      $region38: #{tpu_custom_call.1} parent=5 // pred_check_branch
        %268 = sbr.rel (%p266) target = $region40
      $region39: #{tpu_custom_call.1} parent=5 // pred_region
        %s269 = ssub.s32 %s12, 2
        // Predicated region
        $region41: #{tpu_custom_call.1} parent=39 // pred_check
          %p270 = pneg %p135
        $region42: #{tpu_custom_call.1} parent=39 // pred_check_branch
          %272 = sbr.rel (%p270) target = $region44
        $region43: #{tpu_custom_call.1} parent=39 // pred_region
          %s273 = sand.u32 %s120, 1
          %s274 = scalar_lea.sflag [#allocation3], %s273
          %s275 = sand.u32 %s120, 1
          %s276 = smul.addr %s275, 8
          %s277 = scalar_lea.vmem [#allocation2], %s276
          %279 = dma.done %s274, 128
        $region44: #{tpu_custom_call.1} parent=39 // pred_fallthru
          _
      $region40: #{tpu_custom_call.1} parent=5 // pred_fallthru
        _
    $region6: #{tpu_custom_call.1} parent=1 // loop_footer
      %s16 = sadd.s32 1, %s12
    $region7: #{tpu_custom_call.1} parent=1 // loop_footer_branch
      %11 = sbr.rel target = $region3
    $region8: #{tpu_custom_call.1} parent=1 // loop_exit
      _
    %280 = vsyncpa [#allocation3], 1
    %s281 = scalar_lea.sflag [#allocation3], 1
    %282 = vsyncpa %s281, 1

</llo_original>
